<compile_context>
chip_gen: v7x
topology: tpu7x:2x2x1
jax: 0.10.0
libtpu: 0.0.40
codegen_flags: <defaults>
</compile_context>

<pallas_src>
import functools

import jax
import jax.numpy as jnp
from jax import lax
from jax.experimental import pallas as pl
from jax.experimental.pallas import tpu as pltpu

_EPS = 1e-5
_VMEM_LIMIT = 32 * 1024 * 1024  # safe on v5e/v6e (128 MiB) and v7x (64 MiB)


def _pick_tile_hw(hw, n, c, itemsize, budget_bytes=2 << 20, max_lanes=8192):
    """Largest multiple-of-128 divisor of hw whose (n, c, tile) block fits budget."""
    if hw % 128 != 0:
        return hw  # small / odd spatial size: single lane-major block
    cap = (budget_bytes // max(1, n * c * itemsize)) // 128 * 128
    cap = max(128, min(hw, max_lanes, cap))
    best, t = 128, 128
    while t <= cap:
        if hw % t == 0:
            best = t
        t += 128
    return best


def _stats_kernel(x_ref, gamma_ref, beta_ref, scale_ref, shift_ref,
                  s1_ref, s2_ref, *, inv_count):
    # x_ref:               (N, C, tile_hw)  one branch, one H*W tile
    # gamma_ref/beta_ref:  (C, 1)
    # scale_ref/shift_ref: (C, 1) outputs (resident across the t axis)
    # s1_ref/s2_ref:       (C, 1) f32 VMEM accumulators
    t = pl.program_id(1)

    @pl.when(t == 0)
    def _():
        s1_ref[...] = jnp.zeros_like(s1_ref)
        s2_ref[...] = jnp.zeros_like(s2_ref)

    # Single read of the tile: accumulate sum and sum-of-squares per channel.
    x = x_ref[...].astype(jnp.float32)                 # (N, C, tile)
    xs = jnp.sum(x, axis=0)                            # (C, tile)  VPU adds
    xs2 = jnp.sum(x * x, axis=0)                       # (C, tile)
    s1_ref[...] += jnp.sum(xs, axis=1, keepdims=True)  # (C, 1)     XLU reduce
    s2_ref[...] += jnp.sum(xs2, axis=1, keepdims=True)

    @pl.when(t == pl.num_programs(1) - 1)
    def _():
        # Biased variance (PyTorch training-mode BN), accumulated in f32.
        # NOTE: E[x^2]-E[x]^2 in f32 is adequate here; for extremely large
        # N*H*W a shifted / two-level accumulation would be more robust.
        mean = s1_ref[...] * inv_count                 # (C, 1)
        var = s2_ref[...] * inv_count - mean * mean
        inv_std = lax.rsqrt(var + _EPS)
        scale = gamma_ref[...].astype(jnp.float32) * inv_std
        scale_ref[...] = scale
        shift_ref[...] = beta_ref[...].astype(jnp.float32) - mean * scale


def _norm_kernel(x_ref, scale_ref, shift_ref, o_ref):
    # x_ref/o_ref: (N, C, tile_hw); scale_ref/shift_ref: (C, 1)
    scale = scale_ref[...].reshape(1, -1, 1)           # (1, C, 1)
    shift = shift_ref[...].reshape(1, -1, 1)
    x = x_ref[...].astype(jnp.float32)
    o_ref[...] = (x * scale + shift).astype(o_ref.dtype)


def _bn_forward_stacked(x, gamma, beta, *, tile_hw=None):
    """x: (P, N, C, HW); gamma/beta: (P, C, 1) float32. Returns (P, N, C, HW)."""
    P, N, C, HW = x.shape
    itemsize = jnp.dtype(x.dtype).itemsize
    if tile_hw is None:
        tile_hw = _pick_tile_hw(HW, N, C, itemsize)
    assert HW % tile_hw == 0, (HW, tile_hw)
    T = HW // tile_hw
    inv_count = 1.0 / float(N * HW)

    # Branch axis squeezed out of the kernel view; H*W tiled along lanes.
    x_spec = pl.BlockSpec((None, N, C, tile_hw), lambda p, t: (p, 0, 0, t))
    cvec_spec = pl.BlockSpec((None, C, 1), lambda p, t: (p, 0, 0))

    # Pass 1: per-channel scale/shift from a single tiled read of x.
    scale, shift = pl.pallas_call(
        functools.partial(_stats_kernel, inv_count=inv_count),
        out_shape=(jax.ShapeDtypeStruct((P, C, 1), jnp.float32),
                   jax.ShapeDtypeStruct((P, C, 1), jnp.float32)),
        grid_spec=pltpu.PrefetchScalarGridSpec(
            num_scalar_prefetch=0,
            grid=(P, T),
            in_specs=[x_spec, cvec_spec, cvec_spec],
            out_specs=[cvec_spec, cvec_spec],
            scratch_shapes=[pltpu.VMEM((C, 1), jnp.float32),
                            pltpu.VMEM((C, 1), jnp.float32)],
        ),
        compiler_params=pltpu.CompilerParams(
            dimension_semantics=("parallel", "arbitrary"),
            vmem_limit_bytes=_VMEM_LIMIT,
        ),
    )(x, gamma, beta)

    # Pass 2: y = x * scale + shift, fully parallel grid, lane-dense output.
    y = pl.pallas_call(
        _norm_kernel,
        out_shape=jax.ShapeDtypeStruct((P, N, C, HW), x.dtype),
        grid_spec=pltpu.PrefetchScalarGridSpec(
            num_scalar_prefetch=0,
            grid=(P, T),
            in_specs=[x_spec, cvec_spec, cvec_spec],
            out_specs=x_spec,
        ),
        compiler_params=pltpu.CompilerParams(
            dimension_semantics=("parallel", "parallel"),
            vmem_limit_bytes=_VMEM_LIMIT,
        ),
    )(x, scale, shift)
    return y


def batch_norm2d_parallel(x_parallel, gammas, betas, *, tile_hw=None):
    """Forward of BatchNorm2dParallel.

    x_parallel: list of (N, C, H, W) arrays (NCHW, like PyTorch; all same shape).
    gammas, betas: lists of (C,) arrays (independent BN params per branch).
    Returns a list of (N, C, H, W) arrays.
    """
    P = len(x_parallel)
    N, C, H, W = x_parallel[0].shape
    for xi in x_parallel:
        assert xi.shape == (N, C, H, W)
    HW = H * W

    # Free reshapes (contiguous) + one stack along a new leading branch axis;
    # if the caller already holds a stacked (P, N, C, H, W) tensor, feed
    # _bn_forward_stacked directly and skip the stack copy.
    x = jnp.stack([xi.reshape(N, C, HW) for xi in x_parallel], axis=0)
    gamma = jnp.stack(gammas, axis=0).reshape(P, C, 1).astype(jnp.float32)
    beta = jnp.stack(betas, axis=0).reshape(P, C, 1).astype(jnp.float32)

    y = _bn_forward_stacked(x, gamma, beta, tile_hw=tile_hw)
    return [y[i].reshape(N, C, H, W) for i in range(P)]


def _reference(x_parallel, gammas, betas):
    """Pure-JAX reference (training-mode BatchNorm2d per branch)."""
    outs = []
    for x, g, b in zip(x_parallel, gammas, betas):
        mean = jnp.mean(x, axis=(0, 2, 3), keepdims=True)
        var = jnp.mean((x - mean) ** 2, axis=(0, 2, 3), keepdims=True)
        y = (x - mean) * lax.rsqrt(var + _EPS)
        y = y * g.reshape(1, -1, 1, 1) + b.reshape(1, -1, 1, 1)
        outs.append(y)
    return outs


if __name__ == "__main__":
    num_parallel = 2
    N, C, H, W = 2, 4, 16, 16

    key = jax.random.PRNGKey(0)
    keys = jax.random.split(key, 3 * num_parallel)

    x_parallel = [
        jax.random.normal(keys[i], (N, C, H, W), dtype=jnp.float32)
        for i in range(num_parallel)
    ]
    gammas = [
        1.0 + 0.1 * jax.random.normal(keys[num_parallel + i], (C,), dtype=jnp.float32)
        for i in range(num_parallel)
    ]
    betas = [
        0.1 * jax.random.normal(keys[2 * num_parallel + i], (C,), dtype=jnp.float32)
        for i in range(num_parallel)
    ]

    refs = _reference(x_parallel, gammas, betas)

    # Run once with the auto-selected tile (single H*W block at this size) and
    # once with tile_hw=128 to exercise the multi-tile stats accumulation path.
    for tile in (None, 128):
        outs = batch_norm2d_parallel(x_parallel, gammas, betas, tile_hw=tile)
        outs = [jax.block_until_ready(o) for o in outs]
        for o, r in zip(outs, refs):
            assert o.shape == r.shape and o.dtype == r.dtype
            assert jnp.max(jnp.abs(o - r)) < 2e-4, "mismatch vs reference"

    print("KERNEL_OK")
</pallas_src>

<mosaic_0001>
module attributes {stable_mosaic.version = 11 : i64} {
  func.func @_stats_kernel(%arg0: i32, %arg1: i32, %arg2: memref<1x2x4x256xf32, #tpu.memory_space<vmem>>, %arg3: memref<1x4x1xf32, #tpu.memory_space<vmem>>, %arg4: memref<1x4x1xf32, #tpu.memory_space<vmem>>, %arg5: memref<1x4x1xf32, #tpu.memory_space<vmem>>, %arg6: memref<1x4x1xf32, #tpu.memory_space<vmem>>, %arg7: memref<4x1xf32, #tpu.memory_space<vmem>>, %arg8: memref<4x1xf32, #tpu.memory_space<vmem>>) attributes {dimension_semantics = [#tpu.dimension_semantics<parallel>, #tpu.dimension_semantics<arbitrary>], iteration_bounds = array<i64: 2, 1>, scalar_prefetch = 0 : i64, scratch_operands = 2 : i64, tpu.core_type = #tpu.core_type<tc>, window_params = [{transform_indices = @transform_0, window_bounds = array<i64: 1, 2, 4, 256>}, {transform_indices = @transform_1, window_bounds = array<i64: 1, 4, 1>}, {transform_indices = @transform_2, window_bounds = array<i64: 1, 4, 1>}, {transform_indices = @transform_3, window_bounds = array<i64: 1, 4, 1>}, {transform_indices = @transform_4, window_bounds = array<i64: 1, 4, 1>}]} {
    %c0_i32 = arith.constant 0 : i32
    %0 = arith.cmpi eq, %arg1, %c0_i32 : i32
    %1 = arith.extui %0 : i1 to i32
    %c0_i32_0 = arith.constant 0 : i32
    %2 = arith.cmpi ne, %1, %c0_i32_0 : i32
    scf.if %2 {
      %cst_17 = arith.constant 0.000000e+00 : f32
      %21 = vector.broadcast %cst_17 : f32 to vector<4x1xf32>
      %c0_18 = arith.constant 0 : index
      %c0_19 = arith.constant 0 : index
      %22 = vector.load %arg7[%c0_18, %c0_19] : memref<4x1xf32, #tpu.memory_space<vmem>>, vector<4x1xf32>
      tpu.vector_store %arg7[%c0_18, %c0_19], %21 {strides = array<i32>} : memref<4x1xf32, #tpu.memory_space<vmem>>, vector<4x1xf32>,
      %cst_20 = arith.constant 0.000000e+00 : f32
      %23 = vector.broadcast %cst_20 : f32 to vector<4x1xf32>
      %c0_21 = arith.constant 0 : index
      %c0_22 = arith.constant 0 : index
      %24 = vector.load %arg8[%c0_21, %c0_22] : memref<4x1xf32, #tpu.memory_space<vmem>>, vector<4x1xf32>
      tpu.vector_store %arg8[%c0_21, %c0_22], %23 {strides = array<i32>} : memref<4x1xf32, #tpu.memory_space<vmem>>, vector<4x1xf32>,
    } else {
    }
    %c0 = arith.constant 0 : index
    %c0_1 = arith.constant 0 : index
    %c0_2 = arith.constant 0 : index
    %c0_3 = arith.constant 0 : index
    %3 = vector.load %arg2[%c0, %c0_1, %c0_2, %c0_3] : memref<1x2x4x256xf32, #tpu.memory_space<vmem>>, vector<1x2x4x256xf32>
    %4 = vector.shape_cast %3 : vector<1x2x4x256xf32> to vector<2x4x256xf32>
    %cst = arith.constant dense<0.000000e+00> : vector<4x256xf32>
    %5 = vector.multi_reduction <add>, %4, %cst [0] : vector<2x4x256xf32> to vector<4x256xf32>
    %6 = arith.mulf %4, %4 : vector<2x4x256xf32>
    %cst_4 = arith.constant dense<0.000000e+00> : vector<4x256xf32>
    %7 = vector.multi_reduction <add>, %6, %cst_4 [0] : vector<2x4x256xf32> to vector<4x256xf32>
    %c0_5 = arith.constant 0 : index
    %c0_6 = arith.constant 0 : index
    %8 = vector.load %arg7[%c0_5, %c0_6] : memref<4x1xf32, #tpu.memory_space<vmem>>, vector<4x1xf32>
    %cst_7 = arith.constant dense<0.000000e+00> : vector<4xf32>
    %9 = vector.multi_reduction <add>, %5, %cst_7 [1] : vector<4x256xf32> to vector<4xf32>
    %10 = vector.shape_cast %9 : vector<4xf32> to vector<4x1xf32>
    %11 = arith.addf %8, %10 : vector<4x1xf32>
    %c0_8 = arith.constant 0 : index
    %c0_9 = arith.constant 0 : index
    %12 = vector.load %arg7[%c0_8, %c0_9] : memref<4x1xf32, #tpu.memory_space<vmem>>, vector<4x1xf32>
    tpu.vector_store %arg7[%c0_8, %c0_9], %11 {strides = array<i32>} : memref<4x1xf32, #tpu.memory_space<vmem>>, vector<4x1xf32>,
    %c0_10 = arith.constant 0 : index
    %c0_11 = arith.constant 0 : index
    %13 = vector.load %arg8[%c0_10, %c0_11] : memref<4x1xf32, #tpu.memory_space<vmem>>, vector<4x1xf32>
    %cst_12 = arith.constant dense<0.000000e+00> : vector<4xf32>
    %14 = vector.multi_reduction <add>, %7, %cst_12 [1] : vector<4x256xf32> to vector<4xf32>
    %15 = vector.shape_cast %14 : vector<4xf32> to vector<4x1xf32>
    %16 = arith.addf %13, %15 : vector<4x1xf32>
    %c0_13 = arith.constant 0 : index
    %c0_14 = arith.constant 0 : index
    %17 = vector.load %arg8[%c0_13, %c0_14] : memref<4x1xf32, #tpu.memory_space<vmem>>, vector<4x1xf32>
    tpu.vector_store %arg8[%c0_13, %c0_14], %16 {strides = array<i32>} : memref<4x1xf32, #tpu.memory_space<vmem>>, vector<4x1xf32>,
    %c0_i32_15 = arith.constant 0 : i32
    %18 = arith.cmpi eq, %arg1, %c0_i32_15 : i32
    %19 = arith.extui %18 : i1 to i32
    %c0_i32_16 = arith.constant 0 : i32
    %20 = arith.cmpi ne, %19, %c0_i32_16 : i32
    scf.if %20 {
      %c0_17 = arith.constant 0 : index
      %c0_18 = arith.constant 0 : index
      %21 = vector.load %arg7[%c0_17, %c0_18] : memref<4x1xf32, #tpu.memory_space<vmem>>, vector<4x1xf32>
      %cst_19 = arith.constant 0.001953125 : f32
      %22 = vector.broadcast %cst_19 : f32 to vector<4x1xf32>
      %23 = arith.mulf %21, %22 : vector<4x1xf32>
      %c0_20 = arith.constant 0 : index
      %c0_21 = arith.constant 0 : index
      %24 = vector.load %arg8[%c0_20, %c0_21] : memref<4x1xf32, #tpu.memory_space<vmem>>, vector<4x1xf32>
      %cst_22 = arith.constant 0.001953125 : f32
      %25 = vector.broadcast %cst_22 : f32 to vector<4x1xf32>
      %26 = arith.mulf %24, %25 : vector<4x1xf32>
      %27 = arith.mulf %23, %23 : vector<4x1xf32>
      %28 = arith.subf %26, %27 : vector<4x1xf32>
      %cst_23 = arith.constant 9.99999974E-6 : f32
      %29 = vector.broadcast %cst_23 : f32 to vector<4x1xf32>
      %30 = arith.addf %28, %29 : vector<4x1xf32>
      %31 = math.rsqrt %30 : vector<4x1xf32>
      %c0_24 = arith.constant 0 : index
      %c0_25 = arith.constant 0 : index
      %c0_26 = arith.constant 0 : index
      %32 = vector.load %arg3[%c0_24, %c0_25, %c0_26] : memref<1x4x1xf32, #tpu.memory_space<vmem>>, vector<1x4x1xf32>
      %33 = vector.shape_cast %32 : vector<1x4x1xf32> to vector<4x1xf32>
      %34 = arith.mulf %33, %31 : vector<4x1xf32>
      %c0_27 = arith.constant 0 : index
      %c0_28 = arith.constant 0 : index
      %c0_29 = arith.constant 0 : index
      %35 = vector.load %arg5[%c0_27, %c0_28, %c0_29] : memref<1x4x1xf32, #tpu.memory_space<vmem>>, vector<1x4x1xf32>
      %36 = vector.shape_cast %35 : vector<1x4x1xf32> to vector<4x1xf32>
      %37 = vector.shape_cast %34 : vector<4x1xf32> to vector<1x4x1xf32>
      tpu.vector_store %arg5[%c0_27, %c0_28, %c0_29], %37 {strides = array<i32>} : memref<1x4x1xf32, #tpu.memory_space<vmem>>, vector<1x4x1xf32>,
      %c0_30 = arith.constant 0 : index
      %c0_31 = arith.constant 0 : index
      %c0_32 = arith.constant 0 : index
      %38 = vector.load %arg4[%c0_30, %c0_31, %c0_32] : memref<1x4x1xf32, #tpu.memory_space<vmem>>, vector<1x4x1xf32>
      %39 = vector.shape_cast %38 : vector<1x4x1xf32> to vector<4x1xf32>
      %40 = arith.mulf %23, %34 : vector<4x1xf32>
      %41 = arith.subf %39, %40 : vector<4x1xf32>
      %c0_33 = arith.constant 0 : index
      %c0_34 = arith.constant 0 : index
      %c0_35 = arith.constant 0 : index
      %42 = vector.load %arg6[%c0_33, %c0_34, %c0_35] : memref<1x4x1xf32, #tpu.memory_space<vmem>>, vector<1x4x1xf32>
      %43 = vector.shape_cast %42 : vector<1x4x1xf32> to vector<4x1xf32>
      %44 = vector.shape_cast %41 : vector<4x1xf32> to vector<1x4x1xf32>
      tpu.vector_store %arg6[%c0_33, %c0_34, %c0_35], %44 {strides = array<i32>} : memref<1x4x1xf32, #tpu.memory_space<vmem>>, vector<1x4x1xf32>,
    } else {
    }
    return
  }
  func.func @transform_0(%arg0: i32, %arg1: i32) -> (i32, i32, i32, i32) {
    %c0_i32 = arith.constant 0 : i32
    %c0_i32_0 = arith.constant 0 : i32
    %c0_i32_1 = arith.constant 0 : i32
    return %arg0, %c0_i32, %c0_i32_0, %arg1 : i32, i32, i32, i32
  }
  func.func @transform_1(%arg0: i32, %arg1: i32) -> (i32, i32, i32) {
    %c0_i32 = arith.constant 0 : i32
    %c0_i32_0 = arith.constant 0 : i32
    %c0_i32_1 = arith.constant 0 : i32
    return %arg0, %c0_i32, %c0_i32_0 : i32, i32, i32
  }
  func.func @transform_2(%arg0: i32, %arg1: i32) -> (i32, i32, i32) {
    %c0_i32 = arith.constant 0 : i32
    %c0_i32_0 = arith.constant 0 : i32
    %c0_i32_1 = arith.constant 0 : i32
    return %arg0, %c0_i32, %c0_i32_0 : i32, i32, i32
  }
  func.func @transform_3(%arg0: i32, %arg1: i32) -> (i32, i32, i32) {
    %c0_i32 = arith.constant 0 : i32
    %c0_i32_0 = arith.constant 0 : i32
    %c0_i32_1 = arith.constant 0 : i32
    return %arg0, %c0_i32, %c0_i32_0 : i32, i32, i32
  }
  func.func @transform_4(%arg0: i32, %arg1: i32) -> (i32, i32, i32) {
    %c0_i32 = arith.constant 0 : i32
    %c0_i32_0 = arith.constant 0 : i32
    %c0_i32_1 = arith.constant 0 : i32
    return %arg0, %c0_i32, %c0_i32_0 : i32, i32, i32
  }
}

</mosaic_0001>

<llo_original>
// kernel: tpu_custom_call.1
$region0: #{tpu_custom_call.1}
  #allocation0 [shape = 'u32[]', space=smem, size = 0x4, offset = 0x4, fixed_abs, tag = 'smem constant byte address 0x4 - core index']
  #allocation1 [shape = 'u32[144,128]{1,0:T(1,128)}', space=vmem, size = 0x12000, scoped, tag = 'internal scratch']
  #allocation2 [shape = 'f32[4,1]{1,0:T(4,128)}', space=vmem, size = 0x800, scoped, tag = 'scratch operand']
  #allocation3 [shape = 'f32[4,1]{1,0:T(4,128)}', space=vmem, size = 0x800, scoped, tag = 'scratch operand']
  %s0 = inlined_call_operand.hbm [shape: f32[2,2,4,256], index: 0, kind: input, shape index: {}]
  %s1 = inlined_call_operand.vmem [shape: f32[2,4,1], index: 1, kind: input, shape index: {}]
  %s2 = inlined_call_operand.vmem [shape: f32[2,4,1], index: 2, kind: input, shape index: {}]
  %s3 = inlined_call_operand.vmem [shape: f32[2,4,1], index: 3, kind: output, shape index: {0}]
  %s4 = inlined_call_operand.vmem [shape: f32[2,4,1], index: 4, kind: output, shape index: {1}]
  %5 = xla_tuple %s3, %s4
  %s6 = sld [smem:[#allocation0]]
  $region65: #{tpu_custom_call.1} parent=0
    _
  %s8 = ssub.s32 1, %s6
  %s9 = scalar_select 0, %s8, %s6
  $region1: #{tpu_custom_call.1} parent=0
    #allocation4 [shape = 'u8[16384]{0}', space=vmem, size = 0x4000, scoped, tag = 'input window, operand 0']
    #allocation5 [shape = 's32[2]{0}', space=sflag, size = 0x8, scoped, tag = 'scoped memory for tpu_custom_call.1']
    %10 = vsyncpa [#allocation5], 0
    %s11 = scalar_lea.sflag [#allocation5], 1
    %12 = vsyncpa %s11, 0
    loop: start=0, step=1, limit=4
    $region2: #{tpu_custom_call.1} parent=1 // loop_pre_header
      _
    $region3: #{tpu_custom_call.1} parent=1 // loop_header
      %s14 = sphi 0, %s18
      %p15 = scmp.ge.s32.totalorder %s14, 4
      %s21 = sphi 0, %s33
      %s22 = sphi 0, %s29
      %s23 = sphi 0, %s21
      %s24 = sphi 0, %s22
      %s25 = sphi 0, %s23
      %s26 = sphi 0, %s24
      %s38 = sphi 0, %s40
      %s41 = sphi 0, %s38
      %s42 = sphi 0, %s41
      %s58 = sphi 0, %s42
      %s64 = sphi 0, %s66
      %s67 = sphi 0, %s64
      %s68 = sphi 0, %s67
      %s84 = sphi 0, %s68
      %s90 = sphi 0, %s92
      %s93 = sphi 0, %s90
      %s94 = sphi 0, %s93
      %s110 = sphi 0, %s94
      %s116 = sphi 0, %s118
      %s119 = sphi 0, %s116
      %s120 = sphi 0, %s119
      %s136 = sphi 0, %s120
      %s142 = sphi 0, %s144
      %s145 = sphi 0, %s142
      %s146 = sphi 0, %s145
      %s162 = sphi 0, %s146
    $region4: #{tpu_custom_call.1} parent=1 // loop_header_branch
      %17 = sbr.rel (%p15) target = $region8
    $region5: #{tpu_custom_call.1} parent=1 // loop_body
      %s19 = ssub.s32 %s14, 1
      %s20 = ssub.s32 %s14, 2
      %s27 = sadd.s32 1, %s22
      %p28 = scmp.ge.s32.totalorder %s27, 1
      %s29 = scalar_select %p28, 0, %s27
      %s30 = sadd.s32 1, %s21
      %s31 = scalar_select %p28, %s30, %s21
      %p32 = scmp.ge.s32.totalorder %s31, 2
      %s33 = scalar_select %p32, 0, %s31
      %s34 = ssub.s32 %s21, %s33
      %s35 = ssub.s32 %s22, %s29
      %s36 = sor.u32 %s34, %s35
      %p37 = scmp.eq.s32.totalorder %s36, 0
      %s39 = sadd.s32 %s38, 1
      %s40 = scalar_select %p37, %s38, %s39
      %p43 = pneg %p37
      %p44 = scmp.eq.s32.totalorder %s14, 1
      %p45 = por %p43, %p44
      %p46 = scmp.ne.s32.totalorder %s38, %s41
      %p47 = scmp.eq.s32.totalorder %s14, 0
      %p48 = por %p46, %p47
      %p49 = scmp.ne.s32.totalorder %s38, %s41
      %p50 = scmp.eq.s32.totalorder %s19, 1
      %p51 = por %p49, %p50
      %p52 = scmp.ne.s32.totalorder %s41, %s42
      %p53 = scmp.eq.s32.totalorder %s19, 0
      %p54 = por %p52, %p53
      %p55 = scmp.ne.s32.totalorder %s41, %s42
      %p56 = scmp.eq.s32.totalorder %s20, 1
      %p57 = por %p55, %p56
      %p59 = scmp.ne.s32.totalorder %s42, %s58
      %p60 = scmp.eq.s32.totalorder %s20, 0
      %p61 = por %p59, %p60
      %s62 = ssub.s32 %s21, %s33
      %p63 = scmp.eq.s32.totalorder %s62, 0
      %s65 = sadd.s32 %s64, 1
      %s66 = scalar_select %p63, %s64, %s65
      %p69 = pneg %p63
      %p70 = scmp.eq.s32.totalorder %s14, 1
      %p71 = por %p69, %p70
      %p72 = scmp.ne.s32.totalorder %s64, %s67
      %p73 = scmp.eq.s32.totalorder %s14, 0
      %p74 = por %p72, %p73
      %p75 = scmp.ne.s32.totalorder %s64, %s67
      %p76 = scmp.eq.s32.totalorder %s19, 1
      %p77 = por %p75, %p76
      %p78 = scmp.ne.s32.totalorder %s67, %s68
      %p79 = scmp.eq.s32.totalorder %s19, 0
      %p80 = por %p78, %p79
      %p81 = scmp.ne.s32.totalorder %s67, %s68
      %p82 = scmp.eq.s32.totalorder %s20, 1
      %p83 = por %p81, %p82
      %p85 = scmp.ne.s32.totalorder %s68, %s84
      %p86 = scmp.eq.s32.totalorder %s20, 0
      %p87 = por %p85, %p86
      %s88 = ssub.s32 %s21, %s33
      %p89 = scmp.eq.s32.totalorder %s88, 0
      %s91 = sadd.s32 %s90, 1
      %s92 = scalar_select %p89, %s90, %s91
      %p95 = pneg %p89
      %p96 = scmp.eq.s32.totalorder %s14, 1
      %p97 = por %p95, %p96
      %p98 = scmp.ne.s32.totalorder %s90, %s93
      %p99 = scmp.eq.s32.totalorder %s14, 0
      %p100 = por %p98, %p99
      %p101 = scmp.ne.s32.totalorder %s90, %s93
      %p102 = scmp.eq.s32.totalorder %s19, 1
      %p103 = por %p101, %p102
      %p104 = scmp.ne.s32.totalorder %s93, %s94
      %p105 = scmp.eq.s32.totalorder %s19, 0
      %p106 = por %p104, %p105
      %p107 = scmp.ne.s32.totalorder %s93, %s94
      %p108 = scmp.eq.s32.totalorder %s20, 1
      %p109 = por %p107, %p108
      %p111 = scmp.ne.s32.totalorder %s94, %s110
      %p112 = scmp.eq.s32.totalorder %s20, 0
      %p113 = por %p111, %p112
      %s114 = ssub.s32 %s21, %s33
      %p115 = scmp.eq.s32.totalorder %s114, 0
      %s117 = sadd.s32 %s116, 1
      %s118 = scalar_select %p115, %s116, %s117
      %p121 = pneg %p115
      %p122 = scmp.eq.s32.totalorder %s14, 1
      %p123 = por %p121, %p122
      %p124 = scmp.ne.s32.totalorder %s116, %s119
      %p125 = scmp.eq.s32.totalorder %s14, 0
      %p126 = por %p124, %p125
      %p127 = scmp.ne.s32.totalorder %s116, %s119
      %p128 = scmp.eq.s32.totalorder %s19, 1
      %p129 = por %p127, %p128
      %p130 = scmp.ne.s32.totalorder %s119, %s120
      %p131 = scmp.eq.s32.totalorder %s19, 0
      %p132 = por %p130, %p131
      %p133 = scmp.ne.s32.totalorder %s119, %s120
      %p134 = scmp.eq.s32.totalorder %s20, 1
      %p135 = por %p133, %p134
      %p137 = scmp.ne.s32.totalorder %s120, %s136
      %p138 = scmp.eq.s32.totalorder %s20, 0
      %p139 = por %p137, %p138
      %s140 = ssub.s32 %s21, %s33
      %p141 = scmp.eq.s32.totalorder %s140, 0
      %s143 = sadd.s32 %s142, 1
      %s144 = scalar_select %p141, %s142, %s143
      %p147 = pneg %p141
      %p148 = scmp.eq.s32.totalorder %s14, 1
      %p149 = por %p147, %p148
      %p150 = scmp.ne.s32.totalorder %s142, %s145
      %p151 = scmp.eq.s32.totalorder %s14, 0
      %p152 = por %p150, %p151
      %p153 = scmp.ne.s32.totalorder %s142, %s145
      %p154 = scmp.eq.s32.totalorder %s19, 1
      %p155 = por %p153, %p154
      %p156 = scmp.ne.s32.totalorder %s145, %s146
      %p157 = scmp.eq.s32.totalorder %s19, 0
      %p158 = por %p156, %p157
      %p159 = scmp.ne.s32.totalorder %s145, %s146
      %p160 = scmp.eq.s32.totalorder %s20, 1
      %p161 = por %p159, %p160
      %p163 = scmp.ne.s32.totalorder %s146, %s162
      %p164 = scmp.eq.s32.totalorder %s20, 0
      %p165 = por %p163, %p164
      %p166 = scmp.le.s32.totalorder 1, %s14
      %p167 = scmp.lt.s32.totalorder %s14, 3
      %p168 = pnand %p166, %p167
      %p169 = pneg %p168
      // Predicated region
      $region9: #{tpu_custom_call.1} parent=5 // pred_check
        _
      $region10: #{tpu_custom_call.1} parent=5 // pred_check_branch
        %171 = sbr.rel (%p168) target = $region12
      $region11: #{tpu_custom_call.1} parent=5 // pred_region
        %s172 = ssub.s32 %s14, 1
      $region12: #{tpu_custom_call.1} parent=5 // pred_fallthru
        _
      %p173 = scmp.lt.s32.totalorder %s14, 2
      // Predicated region
      $region13: #{tpu_custom_call.1} parent=5 // pred_check
        %p174 = pneg %p173
      $region14: #{tpu_custom_call.1} parent=5 // pred_check_branch
        %176 = sbr.rel (%p174) target = $region16
      $region15: #{tpu_custom_call.1} parent=5 // pred_region
        // Predicated region
        $region17: #{tpu_custom_call.1} parent=15 // pred_check
          %p177 = pneg %p48
        $region18: #{tpu_custom_call.1} parent=15 // pred_check_branch
          %179 = sbr.rel (%p177) target = $region20
        $region19: #{tpu_custom_call.1} parent=15 // pred_region
          %s180 = sand.u32 %s38, 1
          %s181 = scalar_lea.sflag [#allocation5], %s180
          %s182 = sand.u32 %s38, 1
          %s183 = smul.addr %s182, 16
          %s184 = scalar_lea.vmem [#allocation4], %s183
          %s185 = smul.u32 2, %s22
          %s187 = ssub.s32 256, 256
          %188 = vsyncadd %s181, %s187
          %s189 = smul.addr %s21, 4
          %s190 = sadd.s32 %s185, %s189
          %s191 = smul.addr %s190, 64
          %s192 = scalar_lea.hbm %s0, %s191
          %s193 = sshll.u32 %s184, 4
          %s194 = int_to_ptr.vmem [resolvable:$true] %s193
          %199 = dma.hbm_to_vmem [thread:$0]  %s192, 256, %s194, %s181, 128, 128, 8
        $region20: #{tpu_custom_call.1} parent=15 // pred_fallthru
          _
        // Predicated region
        $region21: #{tpu_custom_call.1} parent=15 // pred_check
          %p200 = pneg %p74
        $region22: #{tpu_custom_call.1} parent=15 // pred_check_branch
          %202 = sbr.rel (%p200) target = $region24
        $region23: #{tpu_custom_call.1} parent=15 // pred_region
          %p203 = scmp.lt.s32.totalorder %s21, 1
          %s204 = scalar_select %p203, %s21, 1
          %s205 = smul.addr %s204, 4
          %s206 = scalar_lea.vmem %s1, %s205
        $region24: #{tpu_custom_call.1} parent=15 // pred_fallthru
          _
        // Predicated region
        $region25: #{tpu_custom_call.1} parent=15 // pred_check
          %p207 = pneg %p100
        $region26: #{tpu_custom_call.1} parent=15 // pred_check_branch
          %209 = sbr.rel (%p207) target = $region28
        $region27: #{tpu_custom_call.1} parent=15 // pred_region
          %p210 = scmp.lt.s32.totalorder %s21, 1
          %s211 = scalar_select %p210, %s21, 1
          %s212 = smul.addr %s211, 4
          %s213 = scalar_lea.vmem %s2, %s212
        $region28: #{tpu_custom_call.1} parent=15 // pred_fallthru
          _
      $region16: #{tpu_custom_call.1} parent=5 // pred_fallthru
        _
      %p214 = scmp.le.s32.totalorder 1, %s14
      %p215 = scmp.lt.s32.totalorder %s14, 3
      %p216 = pnand %p214, %p215
      %p217 = pneg %p216
      // Predicated region
      $region29: #{tpu_custom_call.1} parent=5 // pred_check
        _
      $region30: #{tpu_custom_call.1} parent=5 // pred_check_branch
        %219 = sbr.rel (%p216) target = $region32
      $region31: #{tpu_custom_call.1} parent=5 // pred_region
        %s220 = ssub.s32 %s14, 1
        %s221 = sand.u32 %s41, 1
        %s222 = scalar_lea.sflag [#allocation5], %s221
        %s223 = sand.u32 %s41, 1
        %s224 = smul.addr %s223, 16
        %s225 = scalar_lea.vmem [#allocation4], %s224
        // Predicated region
        $region33: #{tpu_custom_call.1} parent=31 // pred_check
          %p226 = pneg %p54
        $region34: #{tpu_custom_call.1} parent=31 // pred_check_branch
          %228 = sbr.rel (%p226) target = $region36
        $region35: #{tpu_custom_call.1} parent=31 // pred_region
          %229 = dma.done %s222, 256
        $region36: #{tpu_custom_call.1} parent=31 // pred_fallthru
          _
        %s230 = sand.u32 %s41, 1
        %s231 = scalar_lea.sflag [#allocation5], %s230
        %s232 = sand.u32 %s41, 1
        %s233 = smul.addr %s232, 16
        %s234 = scalar_lea.vmem [#allocation4], %s233
        %p235 = pneg %p54
        %p236 = pneg %p51
        %p237 = scmp.lt.s32.totalorder %s23, 1
        %s238 = scalar_select %p237, %s23, 1
        %s239 = smul.addr %s238, 4
        %s240 = scalar_lea.vmem %s1, %s239
        %p241 = pneg %p80
        %p242 = pneg %p77
        %p243 = scmp.lt.s32.totalorder %s23, 1
        %s244 = scalar_select %p243, %s23, 1
        %s245 = smul.addr %s244, 4
        %s246 = scalar_lea.vmem %s2, %s245
        %p247 = pneg %p106
        %p248 = pneg %p103
        %p249 = pneg %p132
        %p250 = pneg %p129
        %p251 = scmp.lt.s32.totalorder %s23, 1
        %s252 = scalar_select %p251, %s23, 1
        %s253 = smul.addr %s252, 4
        %s254 = scalar_lea.vmem %s3, %s253
        %p255 = pneg %p158
        %p256 = pneg %p155
        %p257 = scmp.lt.s32.totalorder %s23, 1
        %s258 = scalar_select %p257, %s23, 1
        %s259 = smul.addr %s258, 4
        %s260 = scalar_lea.vmem %s4, %s259
        %s261 = smul.u32 2, %s24
        %p262 = scmp.lt.s32.totalorder %s23, 1
        %s263 = scalar_select %p262, %s23, 1
        %s264 = smul.addr %s263, 4
        %s265 = scalar_lea.vmem %s1, %s264
        %p266 = scmp.lt.s32.totalorder %s23, 1
        %s267 = scalar_select %p266, %s23, 1
        %s268 = smul.addr %s267, 4
        %s269 = scalar_lea.vmem %s2, %s268
        %p270 = scmp.lt.s32.totalorder %s23, 1
        %s271 = scalar_select %p270, %s23, 1
        %s272 = smul.addr %s271, 4
        %s273 = scalar_lea.vmem %s3, %s272
        %p274 = scmp.lt.s32.totalorder %s23, 1
        %s275 = scalar_select %p274, %s23, 1
        %s276 = smul.addr %s275, 4
        %s277 = scalar_lea.vmem %s4, %s276
        %p278 = scmp.eq.s32.totalorder %s24, 0
        // Predicated region
        $region37: #{tpu_custom_call.1} parent=31 // pred_check
          %p279 = pneg %p278
        $region38: #{tpu_custom_call.1} parent=31 // pred_check_branch
          %281 = sbr.rel (%p279) target = $region40
        $region39: #{tpu_custom_call.1} parent=31 // pred_region
          %vm282 = vcmask 3072
          %283 = vst.msk [vmem:[#allocation2] sm:$0xf] %vm282, 0.0
          %284 = vst.msk [vmem:[#allocation3] sm:$0xf] %vm282, 0.0
        $region40: #{tpu_custom_call.1} parent=31 // pred_fallthru
          _
        %v285 = vld [vmem:[%s225] sm:$0xff]
        %v286 = vld [vmem:[%s225 + $0x8] sm:$0xff]
        %v289 = vcombine.high %v285, %v285
        %v290 = vcombine.high %v286, %v286
        %vm293 = vcmask 1043456
        %v294 = vsel %vm293, %v285, 0.0
        %v295 = vsel %vm293, %v286, 0.0
        %v296 = vadd.f32 %v294, %v295
        %v297 = vsel %vm293, %v289, 0.0
        %v298 = vsel %vm293, %v290, 0.0
        %v299 = vadd.f32 %v297, %v298
        %v300 = vmul.f32 %v285, %v285
        %v301 = vmul.f32 %v286, %v286
        %v304 = vcombine.high %v300, %v300
        %v305 = vcombine.high %v301, %v301
        %v308 = vsel %vm293, %v300, 0.0
        %v309 = vsel %vm293, %v301, 0.0
        %v310 = vadd.f32 %v308, %v309
        %v311 = vsel %vm293, %v304, 0.0
        %v312 = vsel %vm293, %v305, 0.0
        %v313 = vadd.f32 %v311, %v312
        %v314 = vld [vmem:[#allocation2] sm:$0xf]
        %v315 = vsel %vm293, %v296, 0.0
        %v316 = vsel %vm293, %v299, 0.0
        %v317 = vadd.f32 %v315, %v316
        %318 = vadd.xlane.f32.xlu0 %v317
        %v319 = vpop.xlane.xlu0 %318
        %v320 = vadd.f32 %v314, %v319
        %vm321 = vcmask 3072
        %322 = vst.msk [vmem:[#allocation2] sm:$0xf] %vm321, %v320
        %v323 = vld [vmem:[#allocation3] sm:$0xf]
        %v324 = vsel %vm293, %v310, 0.0
        %v325 = vsel %vm293, %v313, 0.0
        %v326 = vadd.f32 %v324, %v325
        %327 = vadd.xlane.f32.xlu0 %v326
        %v328 = vpop.xlane.xlu0 %327
        %v329 = vadd.f32 %v323, %v328
        %330 = vst.msk [vmem:[#allocation3] sm:$0xf] %vm321, %v329
        // Predicated region
        $region41: #{tpu_custom_call.1} parent=31 // pred_check
          %p331 = pneg %p278
        $region42: #{tpu_custom_call.1} parent=31 // pred_check_branch
          %333 = sbr.rel (%p331) target = $region44
        $region43: #{tpu_custom_call.1} parent=31 // pred_region
          %v334 = vld [vmem:[#allocation2] sm:$0xf]
          %v335 = vmul.f32 %v334, 0.001953125
          %v336 = vld [vmem:[#allocation3] sm:$0xf]
          %v337 = vmul.f32 %v336, 0.001953125
          %v338 = vmul.f32 %v335, %v335
          %v339 = vsub.f32 %v337, %v338
          %v340 = vadd.f32 %v339, 1e-05
          %v341 = vrsqrt.pop %v340
          %v342 = vld [vmem:[%s265] sm:$0xf]
          %v343 = vmul.f32 %v342, %v341
          %344 = vst.msk [vmem:[%s273] sm:$0xf] %vm321, %v343
          %v345 = vld [vmem:[%s269] sm:$0xf]
          %v346 = vmul.f32 %v335, %v343
          %v347 = vsub.f32 %v345, %v346
          %348 = vst.msk [vmem:[%s277] sm:$0xf] %vm321, %v347
        $region44: #{tpu_custom_call.1} parent=31 // pred_fallthru
          _
        %p349 = scmp.lt.s32.totalorder %s23, 1
        %s350 = scalar_select %p349, %s23, 1
        %s351 = smul.addr %s350, 4
        %s352 = scalar_lea.vmem %s3, %s351
        %p353 = scmp.lt.s32.totalorder %s23, 1
        %s354 = scalar_select %p353, %s23, 1
        %s355 = smul.addr %s354, 4
        %s356 = scalar_lea.vmem %s4, %s355
        // Predicated region
        $region45: #{tpu_custom_call.1} parent=31 // pred_check
          %p357 = pneg %p129
        $region46: #{tpu_custom_call.1} parent=31 // pred_check_branch
          %359 = sbr.rel (%p357) target = $region48
        $region47: #{tpu_custom_call.1} parent=31 // pred_region
          _
        $region48: #{tpu_custom_call.1} parent=31 // pred_fallthru
          _
        // Predicated region
        $region49: #{tpu_custom_call.1} parent=31 // pred_check
          %p360 = pneg %p155
        $region50: #{tpu_custom_call.1} parent=31 // pred_check_branch
          %362 = sbr.rel (%p360) target = $region52
        $region51: #{tpu_custom_call.1} parent=31 // pred_region
          _
        $region52: #{tpu_custom_call.1} parent=31 // pred_fallthru
          _
      $region32: #{tpu_custom_call.1} parent=5 // pred_fallthru
        _
      %p363 = scmp.le.s32.totalorder 2, %s14
      // Predicated region
      $region53: #{tpu_custom_call.1} parent=5 // pred_check
        %p364 = pneg %p363
      $region54: #{tpu_custom_call.1} parent=5 // pred_check_branch
        %366 = sbr.rel (%p364) target = $region56
      $region55: #{tpu_custom_call.1} parent=5 // pred_region
        %s367 = ssub.s32 %s14, 2
        // Predicated region
        $region57: #{tpu_custom_call.1} parent=55 // pred_check
          %p368 = pneg %p135
        $region58: #{tpu_custom_call.1} parent=55 // pred_check_branch
          %370 = sbr.rel (%p368) target = $region60
        $region59: #{tpu_custom_call.1} parent=55 // pred_region
          %p371 = scmp.lt.s32.totalorder %s25, 1
          %s372 = scalar_select %p371, %s25, 1
          %s373 = smul.addr %s372, 4
          %s374 = scalar_lea.vmem %s3, %s373
        $region60: #{tpu_custom_call.1} parent=55 // pred_fallthru
          _
        // Predicated region
        $region61: #{tpu_custom_call.1} parent=55 // pred_check
          %p375 = pneg %p161
        $region62: #{tpu_custom_call.1} parent=55 // pred_check_branch
          %377 = sbr.rel (%p375) target = $region64
        $region63: #{tpu_custom_call.1} parent=55 // pred_region
          %p378 = scmp.lt.s32.totalorder %s25, 1
          %s379 = scalar_select %p378, %s25, 1
          %s380 = smul.addr %s379, 4
          %s381 = scalar_lea.vmem %s4, %s380
        $region64: #{tpu_custom_call.1} parent=55 // pred_fallthru
          _
      $region56: #{tpu_custom_call.1} parent=5 // pred_fallthru
        _
    $region6: #{tpu_custom_call.1} parent=1 // loop_footer
      %s18 = sadd.s32 1, %s14
    $region7: #{tpu_custom_call.1} parent=1 // loop_footer_branch
      %13 = sbr.rel target = $region3
    $region8: #{tpu_custom_call.1} parent=1 // loop_exit
      _
    %382 = vsyncpa [#allocation5], 1
    %s383 = scalar_lea.sflag [#allocation5], 1
    %384 = vsyncpa %s383, 1

</llo_original>
